<compile_context>
chip_gen: v7x
topology: tpu7x:2x2x1
jax: 0.10.0
libtpu: 0.0.40
codegen_flags: <defaults>
</compile_context>

<pallas_src>
import functools

import jax
import jax.numpy as jnp
from jax.experimental import pallas as pl
from jax.experimental.pallas import tpu as pltpu

# Hyper-parameters from the PyTorch module __init__.
GAMMA_NEG = 3.0
GAMMA_POS = 1.0
GAMMA_CLASS_NG = 1.2
GAMMA_CLASS_POS = 1.0
CLIP = 0.05
EPS = 1e-8


def _round_up(v, m):
    return (v + m - 1) // m * m


def _loss_kernel(x_ref, y_ref, co_ref, w_ref, out_ref, *, total_rows, ragged):
    tb, c = x_ref.shape
    x = x_ref[...].astype(jnp.float32)            # (Tb, C) logits
    y_raw = y_ref[...]                            # (Tb, C) multi-hot targets (0/1), raw dtype
    w = w_ref[...]                                # (1, C) class weights, f32

    # attention_scores: mean of co-occurrence rows selected by y, then
    # row-normalized.  mean = (y @ co) / n_pos; the 1/n_pos factor cancels in
    # the normalization, so a single MXU matmul suffices.  y is exactly 0/1 so
    # the bf16 MXU feed is lossless; accumulate in f32.
    att_raw = jnp.dot(y_raw.astype(jnp.bfloat16), co_ref[...],
                      preferred_element_type=jnp.float32)          # (Tb, C)
    row_sum = jnp.sum(att_raw, axis=-1, keepdims=True)             # (Tb, 1)

    if ragged:
        # Rows past the true batch in the last (out-of-bounds padded) block.
        row0 = pl.program_id(0) * tb
        valid = (jax.lax.broadcasted_iota(jnp.int32, (tb, 1), 0) + row0) < total_rows
        # Guard only padded rows against 0/0; genuine rows with zero positives
        # keep the reference's NaN behaviour (same precondition as PyTorch).
        row_sum = jnp.where(valid, row_sum, 1.0)

    att = att_raw * pl.reciprocal(row_sum, approx=True)

    # sigmoid via a single EUP tanh (instead of exp + reciprocal).
    x_sig = 0.5 * jnp.tanh(0.5 * x) + 0.5
    xs_pos = x_sig * (GAMMA_CLASS_POS - att)
    xs_neg = jnp.minimum(1.0 - x_sig + CLIP, 1.0)                  # clip + clamp(max=1)
    xs_neg = jnp.minimum(
        jnp.where(att_raw == 0.0, xs_neg, xs_neg * GAMMA_CLASS_NG), 1.0)

    # y is exactly 0/1, so the reference math fuses to:
    #   los_pos + los_neg == log(max(pt, EPS)),  pt = y ? xs_pos : xs_neg
    #   one_sided_gamma   == y ? GAMMA_POS : (GAMMA_NEG + w)
    is_pos = y_raw > 0
    pt = jnp.where(is_pos, xs_pos, xs_neg)
    gamma = jnp.where(is_pos, GAMMA_POS, GAMMA_NEG + w)

    if ragged:
        # Padded garbage rows: pt = 1 -> log(pt) = 0 and one_sided_w = 0, so
        # they contribute exactly zero and can never inject NaN/Inf.
        pt = jnp.where(valid, pt, 1.0)

    base = 1.0 - pt                                # in [0, 1]
    # pow(base, gamma) with gamma > 0, reproducing pow(0, g) == 0 exactly.
    one_sided_w = jnp.where(
        base <= 0.0,
        0.0,
        jnp.exp(gamma * jnp.log(jnp.maximum(base, 1e-38))),
    )

    loss = w * jnp.log(jnp.maximum(pt, EPS)) * one_sided_w

    # Lane-dense per-block partial sum, (1, 1, C); final reduction outside.
    out_ref[...] = jnp.sum(loss, axis=0, keepdims=True)[None]


def _choose_tile_b(b, c, x_itemsize, y_itemsize, requested):
    b_up = _round_up(b, 8)
    if requested is not None:
        return max(8, min(_round_up(requested, 8), b_up))
    # Double-buffered x/y tiles must stay under ~8 MiB so the whole footprint
    # (plus resident bf16 co) fits v5e's 16 MiB scoped-VMEM default.
    budget = 8 * 1024 * 1024
    per_row = 2 * c * (x_itemsize + y_itemsize)
    tile = min(2048, max(8, budget // max(per_row, 1)))
    # Keep the grid >= 2 so the 'parallel' axis can split across both
    # TensorCores on v7x (irrelevant on single-TC v5e/v6e).
    if b > 8:
        tile = min(tile, _round_up(-(-b // 2), 8))
    tile = min(_round_up(tile, 8), b_up)
    return max(tile, 8)


@functools.partial(jax.jit, static_argnames=("tile_b",))
def prior_focal_modifier_loss(x, y, co_matrix, weight, *, tile_b=None):
    """x, y: (B, C) (any float dtype); co_matrix: (C, C) column-normalized;
    weight: (C,).  Returns the scalar loss."""
    b, c = x.shape
    tile = _choose_tile_b(b, c, x.dtype.itemsize, y.dtype.itemsize, tile_b)
    nb = pl.cdiv(b, tile)
    ragged = (b % tile) != 0

    co_bf16 = co_matrix.astype(jnp.bfloat16)       # resident in VMEM in bf16
    w2d = weight.reshape(1, c).astype(jnp.float32)

    # Explicit VMEM limit: double-buffered x/y tiles + resident bf16 co +
    # weight/output blocks, with headroom; kept <= 60 MiB for v7x (64 MiB TC).
    vmem_est = (2 * tile * c * (x.dtype.itemsize + y.dtype.itemsize)
                + 2 * c * c * 2 + 4 * c * 4)
    vmem_limit = int(min(max(2 * vmem_est + (1 << 20), 16 << 20), 60 << 20))

    kernel = functools.partial(_loss_kernel, total_rows=b, ragged=ragged)

    partials = pl.pallas_call(
        kernel,
        out_shape=jax.ShapeDtypeStruct((nb, 1, c), jnp.float32),
        grid=(nb,),
        in_specs=[
            pl.BlockSpec((tile, c), lambda i: (i, 0)),   # x tile
            pl.BlockSpec((tile, c), lambda i: (i, 0)),   # y tile
            pl.BlockSpec((c, c), lambda i: (0, 0)),      # co-occurrence (bf16, resident)
            pl.BlockSpec((1, c), lambda i: (0, 0)),      # class weight (resident)
        ],
        out_specs=pl.BlockSpec((1, 1, c), lambda i: (i, 0, 0)),
        compiler_params=pltpu.CompilerParams(
            dimension_semantics=("parallel",),
            vmem_limit_bytes=vmem_limit),
    )(x, y, co_bf16, w2d)

    return -jnp.sum(partials)


def _reference(x, y, co_matrix, weight):
    """Pure-JAX reference mirroring the PyTorch forward."""
    x = x.astype(jnp.float32)
    y = y.astype(jnp.float32)
    w = weight.reshape(1, -1)
    att_raw = y @ co_matrix
    att = att_raw / jnp.sum(att_raw, axis=-1, keepdims=True)
    x_sigmoid = jax.nn.sigmoid(x)
    xs_pos = x_sigmoid * (GAMMA_CLASS_POS - att)
    xs_neg = jnp.minimum(1.0 - x_sigmoid + CLIP, 1.0)
    xs_neg = jnp.minimum(jnp.where(att == 0.0, xs_neg, xs_neg * GAMMA_CLASS_NG), 1.0)
    los_pos = y * jnp.log(jnp.maximum(xs_pos, EPS))
    los_neg = (1.0 - y) * jnp.log(jnp.maximum(xs_neg, EPS))
    loss = (los_pos + los_neg) * w
    pt = xs_pos * y + xs_neg * (1.0 - y)
    g = GAMMA_POS * y + (GAMMA_NEG + w) * (1.0 - y)
    loss = loss * jnp.power(1.0 - pt, g)
    return -jnp.sum(loss)


if __name__ == "__main__":
    B, C = 20, 128
    key = jax.random.PRNGKey(0)
    kx, ky, kd, km = jax.random.split(key, 4)

    # Logits and multi-hot labels (every sample has >= 1 positive, as the
    # PyTorch forward assumes for `co_occurrence_matrix[y[k]==1].mean(dim=0)`).
    x = jax.random.normal(kx, (B, C), dtype=jnp.float32)
    y = (jax.random.uniform(ky, (B, C)) < 0.25).astype(jnp.float32)
    forced = jax.nn.one_hot(jnp.arange(B) % C, C, dtype=jnp.float32)
    y = jnp.maximum(y, forced)

    # Deterministic synthetic "create_weight": class counts -> prob -> weight.
    # TODO(synk): file-based distribution loading has no in-kernel equivalent;
    # replaced with an equivalent synthetic precompute.
    counts = (jax.random.uniform(kd, (C,)) * 1000.0 + 1.0).astype(jnp.float32)
    prob = counts / jnp.sum(counts)
    prob = prob / jnp.max(prob)
    weight = jnp.power(-jnp.log(prob) + 1.0, 1.0 / 3.0)

    # Deterministic synthetic "create_co_occurrence_matrix": column-normalized.
    co_raw = jax.random.uniform(km, (C, C), dtype=jnp.float32) + 0.1
    co_matrix = co_raw / jnp.sum(co_raw, axis=0)

    # Small explicit tile (grid=3, ragged masked last block) and the
    # auto-sized default (grid=2, ragged last block, megacore-friendly).
    out_tiled = prior_focal_modifier_loss(x, y, co_matrix, weight, tile_b=8)
    out_auto = prior_focal_modifier_loss(x, y, co_matrix, weight)
    jax.block_until_ready((out_tiled, out_auto))

    ref = _reference(x, y, co_matrix, weight)
    assert jnp.allclose(out_tiled, ref, rtol=1e-3, atol=1e-3), (out_tiled, ref)
    assert jnp.allclose(out_auto, ref, rtol=1e-3, atol=1e-3), (out_auto, ref)

    print("KERNEL_OK")
</pallas_src>

<mosaic_0001>
module attributes {stable_mosaic.version = 11 : i64} {
  func.func @_loss_kernel(%arg0: i32, %arg1: memref<8x128xf32, #tpu.memory_space<vmem>>, %arg2: memref<8x128xf32, #tpu.memory_space<vmem>>, %arg3: memref<128x128xbf16, #tpu.memory_space<vmem>>, %arg4: memref<1x128xf32, #tpu.memory_space<vmem>>, %arg5: memref<1x1x128xf32, #tpu.memory_space<vmem>>) attributes {dimension_semantics = [#tpu.dimension_semantics<parallel>], iteration_bounds = array<i64: 3>, scalar_prefetch = 0 : i64, scratch_operands = 0 : i64, tpu.core_type = #tpu.core_type<tc>, window_params = [{transform_indices = @transform_0, window_bounds = array<i64: 8, 128>}, {transform_indices = @transform_1, window_bounds = array<i64: 8, 128>}, {pipeline_mode = #tpu.pipeline_mode<synchronous>, transform_indices = @transform_2, window_bounds = array<i64: 128, 128>}, {pipeline_mode = #tpu.pipeline_mode<synchronous>, transform_indices = @transform_3, window_bounds = array<i64: 1, 128>}, {transform_indices = @transform_4, window_bounds = array<i64: 1, 1, 128>}]} {
    %c0 = arith.constant 0 : index
    %c0_0 = arith.constant 0 : index
    %0 = vector.load %arg1[%c0, %c0_0] : memref<8x128xf32, #tpu.memory_space<vmem>>, vector<8x128xf32>
    %c0_1 = arith.constant 0 : index
    %c0_2 = arith.constant 0 : index
    %1 = vector.load %arg2[%c0_1, %c0_2] : memref<8x128xf32, #tpu.memory_space<vmem>>, vector<8x128xf32>
    %c0_3 = arith.constant 0 : index
    %c0_4 = arith.constant 0 : index
    %2 = vector.load %arg4[%c0_3, %c0_4] : memref<1x128xf32, #tpu.memory_space<vmem>>, vector<1x128xf32>
    %3 = arith.truncf %1 : vector<8x128xf32> to vector<8x128xbf16>
    %c0_5 = arith.constant 0 : index
    %c0_6 = arith.constant 0 : index
    %4 = vector.load %arg3[%c0_5, %c0_6] : memref<128x128xbf16, #tpu.memory_space<vmem>>, vector<128x128xbf16>
    %cst = arith.constant dense<0.000000e+00> : vector<8x128xf32>
    %5 = tpu.matmul %3, %4, %cst {dimension_numbers = #tpu.dot_dimension_numbers<[1], [0], [0], [1], [0, 0, 1, 1], [], []>} : vector<8x128xbf16>, vector<128x128xbf16>, vector<8x128xf32> -> vector<8x128xf32>
    %cst_7 = arith.constant dense<0.000000e+00> : vector<8xf32>
    %6 = vector.multi_reduction <add>, %5, %cst_7 [1] : vector<8x128xf32> to vector<8xf32>
    %7 = vector.shape_cast %6 : vector<8xf32> to vector<8x1xf32>
    %c8_i32 = arith.constant 8 : i32
    %8 = arith.muli %arg0, %c8_i32 : i32
    %9 = tpu.iota {dimensions = array<i32: 0>} : vector<8x1xi32>
    %10 = vector.broadcast %8 : i32 to vector<8x1xi32>
    %11 = arith.addi %9, %10 : vector<8x1xi32>
    %c20_i32 = arith.constant 20 : i32
    %12 = vector.broadcast %c20_i32 : i32 to vector<8x1xi32>
    %13 = arith.cmpi slt, %11, %12 : vector<8x1xi32>
    %cst_8 = arith.constant 1.000000e+00 : f32
    %14 = vector.broadcast %cst_8 : f32 to vector<8x1xf32>
    %15 = arith.select %13, %7, %14 : vector<8x1xi1>, vector<8x1xf32>
    %16 = tpu.reciprocal %15 {approx = true} : vector<8x1xf32> -> vector<8x1xf32>
    %17 = vector.broadcast %16 : vector<8x1xf32> to vector<8x128xf32>
    %18 = arith.mulf %5, %17 : vector<8x128xf32>
    %cst_9 = arith.constant 5.000000e-01 : f32
    %19 = vector.broadcast %cst_9 : f32 to vector<8x128xf32>
    %20 = arith.mulf %19, %0 : vector<8x128xf32>
    %21 = math.tanh %20 : vector<8x128xf32>
    %cst_10 = arith.constant 5.000000e-01 : f32
    %22 = vector.broadcast %cst_10 : f32 to vector<8x128xf32>
    %23 = arith.mulf %22, %21 : vector<8x128xf32>
    %cst_11 = arith.constant 5.000000e-01 : f32
    %24 = vector.broadcast %cst_11 : f32 to vector<8x128xf32>
    %25 = arith.addf %23, %24 : vector<8x128xf32>
    %cst_12 = arith.constant 1.000000e+00 : f32
    %26 = vector.broadcast %cst_12 : f32 to vector<8x128xf32>
    %27 = arith.subf %26, %18 : vector<8x128xf32>
    %28 = arith.mulf %25, %27 : vector<8x128xf32>
    %cst_13 = arith.constant 1.000000e+00 : f32
    %29 = vector.broadcast %cst_13 : f32 to vector<8x128xf32>
    %30 = arith.subf %29, %25 : vector<8x128xf32>
    %cst_14 = arith.constant 5.000000e-02 : f32
    %31 = vector.broadcast %cst_14 : f32 to vector<8x128xf32>
    %32 = arith.addf %30, %31 : vector<8x128xf32>
    %cst_15 = arith.constant 1.000000e+00 : f32
    %33 = vector.broadcast %cst_15 : f32 to vector<8x128xf32>
    %34 = arith.minimumf %32, %33 : vector<8x128xf32>
    %cst_16 = arith.constant 0.000000e+00 : f32
    %35 = vector.broadcast %cst_16 : f32 to vector<8x128xf32>
    %36 = arith.cmpf oeq, %5, %35 : vector<8x128xf32>
    %cst_17 = arith.constant 1.200000e+00 : f32
    %37 = vector.broadcast %cst_17 : f32 to vector<8x128xf32>
    %38 = arith.mulf %34, %37 : vector<8x128xf32>
    %39 = arith.select %36, %34, %38 : vector<8x128xi1>, vector<8x128xf32>
    %cst_18 = arith.constant 1.000000e+00 : f32
    %40 = vector.broadcast %cst_18 : f32 to vector<8x128xf32>
    %41 = arith.minimumf %39, %40 : vector<8x128xf32>
    %cst_19 = arith.constant 0.000000e+00 : f32
    %42 = vector.broadcast %cst_19 : f32 to vector<8x128xf32>
    %43 = arith.cmpf ogt, %1, %42 : vector<8x128xf32>
    %44 = arith.select %43, %28, %41 : vector<8x128xi1>, vector<8x128xf32>
    %cst_20 = arith.constant 3.000000e+00 : f32
    %45 = vector.broadcast %cst_20 : f32 to vector<1x128xf32>
    %46 = arith.addf %45, %2 : vector<1x128xf32>
    %cst_21 = arith.constant 1.000000e+00 : f32
    %47 = vector.broadcast %cst_21 : f32 to vector<8x128xf32>
    %48 = vector.shape_cast %46 : vector<1x128xf32> to vector<1x128xf32>
    %49 = vector.broadcast %48 : vector<1x128xf32> to vector<8x128xf32>
    %50 = arith.select %43, %47, %49 : vector<8x128xi1>, vector<8x128xf32>
    %cst_22 = arith.constant 1.000000e+00 : f32
    %51 = vector.shape_cast %13 : vector<8x1xi1> to vector<8x1xi1>
    %52 = vector.broadcast %51 : vector<8x1xi1> to vector<8x128xi1>
    %53 = vector.broadcast %cst_22 : f32 to vector<8x128xf32>
    %54 = arith.select %52, %44, %53 : vector<8x128xi1>, vector<8x128xf32>
    %cst_23 = arith.constant 1.000000e+00 : f32
    %55 = vector.broadcast %cst_23 : f32 to vector<8x128xf32>
    %56 = arith.subf %55, %54 : vector<8x128xf32>
    %cst_24 = arith.constant 0.000000e+00 : f32
    %57 = vector.broadcast %cst_24 : f32 to vector<8x128xf32>
    %58 = arith.cmpf ole, %56, %57 : vector<8x128xf32>
    %cst_25 = arith.constant 9.99999935E-39 : f32
    %59 = vector.broadcast %cst_25 : f32 to vector<8x128xf32>
    %60 = arith.maximumf %56, %59 : vector<8x128xf32>
    %61 = math.log %60 : vector<8x128xf32>
    %62 = arith.mulf %50, %61 : vector<8x128xf32>
    %63 = math.exp %62 : vector<8x128xf32>
    %cst_26 = arith.constant 0.000000e+00 : f32
    %64 = vector.broadcast %cst_26 : f32 to vector<8x128xf32>
    %65 = arith.select %58, %64, %63 : vector<8x128xi1>, vector<8x128xf32>
    %cst_27 = arith.constant 9.99999993E-9 : f32
    %66 = vector.broadcast %cst_27 : f32 to vector<8x128xf32>
    %67 = arith.maximumf %54, %66 : vector<8x128xf32>
    %68 = math.log %67 : vector<8x128xf32>
    %69 = vector.broadcast %2 : vector<1x128xf32> to vector<8x128xf32>
    %70 = arith.mulf %69, %68 : vector<8x128xf32>
    %71 = arith.mulf %70, %65 : vector<8x128xf32>
    %cst_28 = arith.constant dense<0.000000e+00> : vector<128xf32>
    %72 = vector.multi_reduction <add>, %71, %cst_28 [0] : vector<8x128xf32> to vector<128xf32>
    %73 = vector.shape_cast %72 : vector<128xf32> to vector<1x128xf32>
    %74 = vector.shape_cast %73 : vector<1x128xf32> to vector<1x1x128xf32>
    %c0_29 = arith.constant 0 : index
    %c0_30 = arith.constant 0 : index
    %c0_31 = arith.constant 0 : index
    %75 = vector.load %arg5[%c0_29, %c0_30, %c0_31] : memref<1x1x128xf32, #tpu.memory_space<vmem>>, vector<1x1x128xf32>
    tpu.vector_store %arg5[%c0_29, %c0_30, %c0_31], %74 {strides = array<i32>} : memref<1x1x128xf32, #tpu.memory_space<vmem>>, vector<1x1x128xf32>,
    return
  }
  func.func @transform_0(%arg0: i32) -> (i32, i32) {
    %c0_i32 = arith.constant 0 : i32
    %c0_i32_0 = arith.constant 0 : i32
    return %arg0, %c0_i32 : i32, i32
  }
  func.func @transform_1(%arg0: i32) -> (i32, i32) {
    %c0_i32 = arith.constant 0 : i32
    %c0_i32_0 = arith.constant 0 : i32
    return %arg0, %c0_i32 : i32, i32
  }
  func.func @transform_2(%arg0: i32) -> (i32, i32) {
    %c0_i32 = arith.constant 0 : i32
    %c0_i32_0 = arith.constant 0 : i32
    %c0_i32_1 = arith.constant 0 : i32
    return %c0_i32, %c0_i32_0 : i32, i32
  }
  func.func @transform_3(%arg0: i32) -> (i32, i32) {
    %c0_i32 = arith.constant 0 : i32
    %c0_i32_0 = arith.constant 0 : i32
    %c0_i32_1 = arith.constant 0 : i32
    return %c0_i32, %c0_i32_0 : i32, i32
  }
  func.func @transform_4(%arg0: i32) -> (i32, i32, i32) {
    %c0_i32 = arith.constant 0 : i32
    %c0_i32_0 = arith.constant 0 : i32
    %c0_i32_1 = arith.constant 0 : i32
    return %arg0, %c0_i32, %c0_i32_0 : i32, i32, i32
  }
}

</mosaic_0001>

<llo_original>
// kernel: prior_focal_modifier_loss.1
$region0: #{prior_focal_modifier_loss.1}
  #allocation0 [shape = 'u32[]', space=smem, size = 0x4, offset = 0x4, fixed_abs, tag = 'smem constant byte address 0x4 - core index']
  #allocation1 [shape = 'u32[144,128]{1,0:T(1,128)}', space=vmem, size = 0x12000, scoped, tag = 'internal scratch']
  %s0 = inlined_call_operand.vmem [shape: f32[20,128], index: 0, kind: input, shape index: {}]
  %s1 = inlined_call_operand.vmem [shape: f32[20,128], index: 1, kind: input, shape index: {}]
  %s2 = inlined_call_operand.vmem [shape: bf16[128,128], index: 2, kind: input, shape index: {}]
  %s3 = inlined_call_operand.vmem [shape: f32[1,128], index: 3, kind: input, shape index: {}]
  %s4 = inlined_call_operand.vmem [shape: f32[3,1,128], index: 4, kind: output, shape index: {}]
  %s5 = sld [smem:[#allocation0]]
  $region49: #{prior_focal_modifier_loss.1} parent=0
    _
  %s7 = ssub.s32 1, %s5
  %s8 = scalar_select 0, %s7, %s5
  loop: start=0, step=1, limit=5
  $region2: #{prior_focal_modifier_loss.1} parent=0 // loop_pre_header
    _
  $region3: #{prior_focal_modifier_loss.1} parent=0 // loop_header
    %s10 = sphi 0, %s14
    %p11 = scmp.ge.s32.totalorder %s10, 5
    %s20 = sphi 0, %s22
    %s23 = sphi 0, %s20
    %s24 = sphi 0, %s23
    %s40 = sphi 0, %s24
    %s46 = sphi 0, %s48
    %s49 = sphi 0, %s46
    %s50 = sphi 0, %s49
    %s66 = sphi 0, %s50
    %s70 = sphi 0, %s70
    %s72 = sphi 0, %s70
    %s73 = sphi 0, %s72
    %s87 = sphi 0, %s73
    %s91 = sphi 0, %s91
    %s93 = sphi 0, %s91
    %s94 = sphi 0, %s93
    %s108 = sphi 0, %s94
    %s114 = sphi 0, %s116
    %s117 = sphi 0, %s114
    %s118 = sphi 0, %s117
    %s134 = sphi 0, %s118
  $region4: #{prior_focal_modifier_loss.1} parent=0 // loop_header_branch
    %13 = sbr.rel (%p11) target = $region8
  $region5: #{prior_focal_modifier_loss.1} parent=0 // loop_body
    %s15 = ssub.s32 %s10, 1
    %s16 = ssub.s32 %s10, 2
    %s17 = sadd.s32 %s10, 1
    %s18 = ssub.s32 %s10, %s17
    %p19 = scmp.eq.s32.totalorder %s18, 0
    %s21 = sadd.s32 %s20, 1
    %s22 = scalar_select %p19, %s20, %s21
    %p25 = pneg %p19
    %p26 = scmp.eq.s32.totalorder %s10, 2
    %p27 = por %p25, %p26
    %p28 = scmp.ne.s32.totalorder %s20, %s23
    %p29 = scmp.eq.s32.totalorder %s10, 0
    %p30 = por %p28, %p29
    %p31 = scmp.ne.s32.totalorder %s20, %s23
    %p32 = scmp.eq.s32.totalorder %s15, 2
    %p33 = por %p31, %p32
    %p34 = scmp.ne.s32.totalorder %s23, %s24
    %p35 = scmp.eq.s32.totalorder %s15, 0
    %p36 = por %p34, %p35
    %p37 = scmp.ne.s32.totalorder %s23, %s24
    %p38 = scmp.eq.s32.totalorder %s16, 2
    %p39 = por %p37, %p38
    %p41 = scmp.ne.s32.totalorder %s24, %s40
    %p42 = scmp.eq.s32.totalorder %s16, 0
    %p43 = por %p41, %p42
    %s44 = ssub.s32 %s10, %s17
    %p45 = scmp.eq.s32.totalorder %s44, 0
    %s47 = sadd.s32 %s46, 1
    %s48 = scalar_select %p45, %s46, %s47
    %p51 = pneg %p45
    %p52 = scmp.eq.s32.totalorder %s10, 2
    %p53 = por %p51, %p52
    %p54 = scmp.ne.s32.totalorder %s46, %s49
    %p55 = scmp.eq.s32.totalorder %s10, 0
    %p56 = por %p54, %p55
    %p57 = scmp.ne.s32.totalorder %s46, %s49
    %p58 = scmp.eq.s32.totalorder %s15, 2
    %p59 = por %p57, %p58
    %p60 = scmp.ne.s32.totalorder %s49, %s50
    %p61 = scmp.eq.s32.totalorder %s15, 0
    %p62 = por %p60, %p61
    %p63 = scmp.ne.s32.totalorder %s49, %s50
    %p64 = scmp.eq.s32.totalorder %s16, 2
    %p65 = por %p63, %p64
    %p67 = scmp.ne.s32.totalorder %s50, %s66
    %p68 = scmp.eq.s32.totalorder %s16, 0
    %p69 = por %p67, %p68
    %s71 = sadd.s32 %s70, 1
    %p74 = scmp.eq.s32.totalorder %s10, 2
    %p75 = scmp.ne.s32.totalorder %s70, %s72
    %p76 = scmp.eq.s32.totalorder %s10, 0
    %p77 = por %p75, %p76
    %p78 = scmp.ne.s32.totalorder %s70, %s72
    %p79 = scmp.eq.s32.totalorder %s15, 2
    %p80 = por %p78, %p79
    %p81 = scmp.ne.s32.totalorder %s72, %s73
    %p82 = scmp.eq.s32.totalorder %s15, 0
    %p83 = por %p81, %p82
    %p84 = scmp.ne.s32.totalorder %s72, %s73
    %p85 = scmp.eq.s32.totalorder %s16, 2
    %p86 = por %p84, %p85
    %p88 = scmp.ne.s32.totalorder %s73, %s87
    %p89 = scmp.eq.s32.totalorder %s16, 0
    %p90 = por %p88, %p89
    %s92 = sadd.s32 %s91, 1
    %p95 = scmp.eq.s32.totalorder %s10, 2
    %p96 = scmp.ne.s32.totalorder %s91, %s93
    %p97 = scmp.eq.s32.totalorder %s10, 0
    %p98 = por %p96, %p97
    %p99 = scmp.ne.s32.totalorder %s91, %s93
    %p100 = scmp.eq.s32.totalorder %s15, 2
    %p101 = por %p99, %p100
    %p102 = scmp.ne.s32.totalorder %s93, %s94
    %p103 = scmp.eq.s32.totalorder %s15, 0
    %p104 = por %p102, %p103
    %p105 = scmp.ne.s32.totalorder %s93, %s94
    %p106 = scmp.eq.s32.totalorder %s16, 2
    %p107 = por %p105, %p106
    %p109 = scmp.ne.s32.totalorder %s94, %s108
    %p110 = scmp.eq.s32.totalorder %s16, 0
    %p111 = por %p109, %p110
    %s112 = ssub.s32 %s10, %s17
    %p113 = scmp.eq.s32.totalorder %s112, 0
    %s115 = sadd.s32 %s114, 1
    %s116 = scalar_select %p113, %s114, %s115
    %p119 = pneg %p113
    %p120 = scmp.eq.s32.totalorder %s10, 2
    %p121 = por %p119, %p120
    %p122 = scmp.ne.s32.totalorder %s114, %s117
    %p123 = scmp.eq.s32.totalorder %s10, 0
    %p124 = por %p122, %p123
    %p125 = scmp.ne.s32.totalorder %s114, %s117
    %p126 = scmp.eq.s32.totalorder %s15, 2
    %p127 = por %p125, %p126
    %p128 = scmp.ne.s32.totalorder %s117, %s118
    %p129 = scmp.eq.s32.totalorder %s15, 0
    %p130 = por %p128, %p129
    %p131 = scmp.ne.s32.totalorder %s117, %s118
    %p132 = scmp.eq.s32.totalorder %s16, 2
    %p133 = por %p131, %p132
    %p135 = scmp.ne.s32.totalorder %s118, %s134
    %p136 = scmp.eq.s32.totalorder %s16, 0
    %p137 = por %p135, %p136
    %p138 = scmp.le.s32.totalorder 1, %s10
    %p139 = scmp.lt.s32.totalorder %s10, 4
    %p140 = pnand %p138, %p139
    %p141 = pneg %p140
    // Predicated region
    $region9: #{prior_focal_modifier_loss.1} parent=5 // pred_check
      _
    $region10: #{prior_focal_modifier_loss.1} parent=5 // pred_check_branch
      %143 = sbr.rel (%p140) target = $region12
    $region11: #{prior_focal_modifier_loss.1} parent=5 // pred_region
      %s144 = ssub.s32 %s10, 1
      // Predicated region
      $region13: #{prior_focal_modifier_loss.1} parent=11 // pred_check
        %p145 = pneg %p83
      $region14: #{prior_focal_modifier_loss.1} parent=11 // pred_check_branch
        %147 = sbr.rel (%p145) target = $region16
      $region15: #{prior_focal_modifier_loss.1} parent=11 // pred_region
        _
      $region16: #{prior_focal_modifier_loss.1} parent=11 // pred_fallthru
        _
      // Predicated region
      $region17: #{prior_focal_modifier_loss.1} parent=11 // pred_check
        %p148 = pneg %p104
      $region18: #{prior_focal_modifier_loss.1} parent=11 // pred_check_branch
        %150 = sbr.rel (%p148) target = $region20
      $region19: #{prior_focal_modifier_loss.1} parent=11 // pred_region
        _
      $region20: #{prior_focal_modifier_loss.1} parent=11 // pred_fallthru
        _
    $region12: #{prior_focal_modifier_loss.1} parent=5 // pred_fallthru
      _
    %p151 = scmp.lt.s32.totalorder %s10, 3
    // Predicated region
    $region21: #{prior_focal_modifier_loss.1} parent=5 // pred_check
      %p152 = pneg %p151
    $region22: #{prior_focal_modifier_loss.1} parent=5 // pred_check_branch
      %154 = sbr.rel (%p152) target = $region24
    $region23: #{prior_focal_modifier_loss.1} parent=5 // pred_region
      // Predicated region
      $region25: #{prior_focal_modifier_loss.1} parent=23 // pred_check
        %p155 = pneg %p30
      $region26: #{prior_focal_modifier_loss.1} parent=23 // pred_check_branch
        %157 = sbr.rel (%p155) target = $region28
      $region27: #{prior_focal_modifier_loss.1} parent=23 // pred_region
        %p158 = scmp.lt.s32.totalorder %s10, 2
        %s159 = scalar_select %p158, %s10, 2
        %s160 = smul.addr %s159, 8
        %s161 = scalar_lea.vmem %s0, %s160
      $region28: #{prior_focal_modifier_loss.1} parent=23 // pred_fallthru
        _
      // Predicated region
      $region29: #{prior_focal_modifier_loss.1} parent=23 // pred_check
        %p162 = pneg %p56
      $region30: #{prior_focal_modifier_loss.1} parent=23 // pred_check_branch
        %164 = sbr.rel (%p162) target = $region32
      $region31: #{prior_focal_modifier_loss.1} parent=23 // pred_region
        %p165 = scmp.lt.s32.totalorder %s10, 2
        %s166 = scalar_select %p165, %s10, 2
        %s167 = smul.addr %s166, 8
        %s168 = scalar_lea.vmem %s1, %s167
      $region32: #{prior_focal_modifier_loss.1} parent=23 // pred_fallthru
        _
    $region24: #{prior_focal_modifier_loss.1} parent=5 // pred_fallthru
      _
    %p169 = scmp.le.s32.totalorder 1, %s10
    %p170 = scmp.lt.s32.totalorder %s10, 4
    %p171 = pnand %p169, %p170
    %p172 = pneg %p171
    // Predicated region
    $region33: #{prior_focal_modifier_loss.1} parent=5 // pred_check
      _
    $region34: #{prior_focal_modifier_loss.1} parent=5 // pred_check_branch
      %174 = sbr.rel (%p171) target = $region36
    $region35: #{prior_focal_modifier_loss.1} parent=5 // pred_region
      %s175 = ssub.s32 %s10, 1
      %p176 = scmp.lt.s32.totalorder %s15, 2
      %s177 = scalar_select %p176, %s15, 2
      %s178 = smul.addr %s177, 8
      %s179 = scalar_lea.vmem %s0, %s178
      %p180 = pneg %p36
      %p181 = pneg %p33
      %p182 = scmp.lt.s32.totalorder %s15, 2
      %s183 = scalar_select %p182, %s15, 2
      %s184 = smul.addr %s183, 8
      %s185 = scalar_lea.vmem %s1, %s184
      %p186 = pneg %p62
      %p187 = pneg %p59
      %p188 = pneg %p83
      %p189 = pneg %p80
      %p190 = pneg %p104
      %p191 = pneg %p101
      %p192 = pneg %p130
      %p193 = pneg %p127
      %p194 = scmp.lt.s32.totalorder %s15, 2
      %s195 = scalar_select %p194, %s15, 2
      %s196 = scalar_lea.vmem %s4, %s195
      %p197 = scmp.lt.s32.totalorder %s15, 2
      %s198 = scalar_select %p197, %s15, 2
      %s199 = smul.addr %s198, 8
      %s200 = scalar_lea.vmem %s0, %s199
      %p201 = scmp.lt.s32.totalorder %s15, 2
      %s202 = scalar_select %p201, %s15, 2
      %s203 = smul.addr %s202, 8
      %s204 = scalar_lea.vmem %s1, %s203
      %p205 = scmp.lt.s32.totalorder %s15, 2
      %s206 = scalar_select %p205, %s15, 2
      %s207 = scalar_lea.vmem %s4, %s206
      %v209 = vld [vmem:[%s200] sm:$0xff]
      %v210 = vld [vmem:[%s204] sm:$0xff]
      %v211 = vld [vmem:[%s3] sm:$0x1]
      %v212 = vpack.c.bf16 %v210, %v210
      %v213 = vld [vmem:[%s2] sm:$0xf]
      %v214 = vld [vmem:[%s2 + $0x4] sm:$0xf]
      %v215 = vld [vmem:[%s2 + $0x8] sm:$0xf]
      %v216 = vld [vmem:[%s2 + $0xc] sm:$0xf]
      %v217 = vld [vmem:[%s2 + $0x10] sm:$0xf]
      %v218 = vld [vmem:[%s2 + $0x14] sm:$0xf]
      %v219 = vld [vmem:[%s2 + $0x18] sm:$0xf]
      %v220 = vld [vmem:[%s2 + $0x1c] sm:$0xf]
      %v221 = vld [vmem:[%s2 + $0x20] sm:$0xf]
      %v222 = vld [vmem:[%s2 + $0x24] sm:$0xf]
      %v223 = vld [vmem:[%s2 + $0x28] sm:$0xf]
      %v224 = vld [vmem:[%s2 + $0x2c] sm:$0xf]
      %v225 = vld [vmem:[%s2 + $0x30] sm:$0xf]
      %v226 = vld [vmem:[%s2 + $0x34] sm:$0xf]
      %v227 = vld [vmem:[%s2 + $0x38] sm:$0xf]
      %v228 = vld [vmem:[%s2 + $0x3c] sm:$0xf]
      %v245 = vunpack.c.l.b16 %v213
      %v246 = vunpack.c.l.b16 %v214
      %v247 = vunpack.c.l.b16 %v215
      %v248 = vunpack.c.l.b16 %v216
      %v249 = vunpack.c.l.b16 %v217
      %v250 = vunpack.c.l.b16 %v218
      %v251 = vunpack.c.l.b16 %v219
      %v252 = vunpack.c.l.b16 %v220
      %v253 = vunpack.c.l.b16 %v221
      %v254 = vunpack.c.l.b16 %v222
      %v255 = vunpack.c.l.b16 %v223
      %v256 = vunpack.c.l.b16 %v224
      %v257 = vunpack.c.l.b16 %v225
      %v258 = vunpack.c.l.b16 %v226
      %v259 = vunpack.c.l.b16 %v227
      %v260 = vunpack.c.l.b16 %v228
      %v261 = vpack.c.b16 %v246, %v245
      %v262 = vpack.c.b16 %v248, %v247
      %v263 = vpack.c.b16 %v250, %v249
      %v264 = vpack.c.b16 %v252, %v251
      %v265 = vpack.c.b16 %v254, %v253
      %v266 = vpack.c.b16 %v256, %v255
      %v267 = vpack.c.b16 %v258, %v257
      %v268 = vpack.c.b16 %v260, %v259
      %277 = vmatprep.subr.bf16.mxu0 0
      %278 = vmatpush1.bf16.msra.mxu0 %v261
      %279 = vmatprep.subr.bf16.mxu0 0
      %280 = vmatpush1.bf16.msra.mxu0 %v262
      %281 = vmatprep.subr.bf16.mxu0 0
      %282 = vmatpush1.bf16.msra.mxu0 %v263
      %283 = vmatprep.subr.bf16.mxu0 0
      %284 = vmatpush1.bf16.msra.mxu0 %v264
      %285 = vmatprep.subr.bf16.mxu0 0
      %286 = vmatpush1.bf16.msra.mxu0 %v265
      %287 = vmatprep.subr.bf16.mxu0 0
      %288 = vmatpush1.bf16.msra.mxu0 %v266
      %289 = vmatprep.subr.bf16.mxu0 0
      %290 = vmatpush1.bf16.msra.mxu0 %v267
      %291 = vmatprep.subr.bf16.mxu0 0
      %292 = vmatpush1.bf16.msra.mxu0 %v268
      %293 = vmatprep.subr.bf16.mxu0 0
      %294 = vmatpush1.bf16.msra.mxu0 0
      %295 = vmatprep.subr.bf16.mxu0 0
      %296 = vmatpush1.bf16.msra.mxu0 0
      %297 = vmatprep.subr.bf16.mxu0 0
      %298 = vmatpush1.bf16.msra.mxu0 0
      %299 = vmatprep.subr.bf16.mxu0 0
      %300 = vmatpush1.bf16.msra.mxu0 0
      %301 = vmatprep.subr.bf16.mxu0 0
      %302 = vmatpush1.bf16.msra.mxu0 0
      %303 = vmatprep.subr.bf16.mxu0 0
      %304 = vmatpush1.bf16.msra.mxu0 0
      %305 = vmatprep.subr.bf16.mxu0 0
      %306 = vmatpush1.bf16.msra.mxu0 0
      %307 = vmatprep.subr.bf16.mxu0 0
      %308 = vmatpush1.bf16.msra.mxu0 0
      %309 = vmatprep.mubr.bf16.mxu0 0
      %310 = vmatmul.mubr.bf16.gmra.mrb[0].mxu0 %v212
      %v311 = vpop.f32.mrb[0].mxu0
      %v312 = vadd.f32 0.0, %v311
      %v313 = vpop.f32.mrb[0].mxu0
      %v314 = vpop.f32.mrb[0].mxu0
      %v315 = vpop.f32.mrb[0].mxu0
      %316 = vdwg.mxu0
      %317 = vadd.xlane.f32.xlu0 %v312
      %v318 = vpop.xlane.xlu0 %317
      %s319 = smul.u32 %s15, 8
      %v320 = vlaneseq
      %v321 = vshrl.u32 %v320, 7
      %v322 = vstv %s319
      %v323 = vadd.s32 %v321, %v322
      %vm324 = vcmp.lt.s32.totalorder %v323, 20
      %v325 = vsel %vm324, %v318, 1.0
      %v326 = vrcp.pop %v325
      %v327 = vmul.f32 %v312, %v326
      %v328 = vmul.f32 %v209, 0.5
      %v329 = vtanh.pop %v328
      %v330 = vmul.f32 %v329, 0.5
      %v331 = vadd.f32 %v330, 0.5
      %v332 = vsub.f32 1.0, %v327
      %v333 = vmul.f32 %v331, %v332
      %v334 = vsub.f32 1.0, %v331
      %v335 = vadd.f32 %v334, 0.05
      %v336 = vmin.f32 %v335, 1.0
      %vm337 = vcmp.eq.f32.partialorder %v312, 0.0
      %v338 = vmul.f32 %v336, 1.2
      %v339 = vsel %vm337, %v336, %v338
      %v340 = vmin.f32 %v339, 1.0
      %vm341 = vcmp.gt.f32.partialorder %v210, 0.0
      %v342 = vsel %vm341, %v333, %v340
      %v343 = vadd.f32 %v211, 3.0
      %v345 = vlaneseq
      %v346 = vshrl.u32 %v345, 7
      %v347 = vsub.s32 0, %v346
      %v348 = vrot.slane %v343, %v347
      %v350 = vsel %vm341, 1.0, %v348
      %v351 = vsel %vm324, 1, 0
      %vm352 = vcmp.eq.s32.totalorder %v351, 1
      %v353 = vsel %vm352, %v342, 1.0
      %v354 = vsub.f32 1.0, %v353
      %vm355 = vcmp.le.f32.partialorder %v354, 0.0
      %v356 = vmax.f32 %v354, 1e-38
      %v357 = vlog2.pop %v356
      %v358 = vmul.f32 %v357, 0.6931472
      %v359 = vmul.f32 %v350, %v358
      %v360 = vmul.f32 %v359, 1.442695
      %v361 = vpow.pop %v360
      %v362 = vsel %vm355, 0.0, %v361
      %v363 = vmax.f32 %v353, 1e-08
      %v364 = vlog2.pop %v363
      %v365 = vmul.f32 %v364, 0.6931472
      %v367 = vlaneseq
      %v368 = vshrl.u32 %v367, 7
      %v369 = vsub.s32 0, %v368
      %v370 = vrot.slane %v211, %v369
      %v372 = vmul.f32 %v370, %v365
      %v373 = vmul.f32 %v372, %v362
      %v374 = vrot.slane %v373, 4
      %v375 = vadd.f32 %v373, %v374
      %v376 = vrot.slane %v375, 2
      %v377 = vadd.f32 %v375, %v376
      %v378 = vrot.slane %v377, 1
      %v379 = vadd.f32 %v377, %v378
      %380 = vst [vmem:[%s207] sm:$0x1] %v379
      %p381 = scmp.lt.s32.totalorder %s15, 2
      %s382 = scalar_select %p381, %s15, 2
      %s383 = scalar_lea.vmem %s4, %s382
      // Predicated region
      $region37: #{prior_focal_modifier_loss.1} parent=35 // pred_check
        %p384 = pneg %p127
      $region38: #{prior_focal_modifier_loss.1} parent=35 // pred_check_branch
        %386 = sbr.rel (%p384) target = $region40
      $region39: #{prior_focal_modifier_loss.1} parent=35 // pred_region
        _
      $region40: #{prior_focal_modifier_loss.1} parent=35 // pred_fallthru
        _
    $region36: #{prior_focal_modifier_loss.1} parent=5 // pred_fallthru
      _
    %p387 = scmp.le.s32.totalorder 2, %s10
    // Predicated region
    $region41: #{prior_focal_modifier_loss.1} parent=5 // pred_check
      %p388 = pneg %p387
    $region42: #{prior_focal_modifier_loss.1} parent=5 // pred_check_branch
      %390 = sbr.rel (%p388) target = $region44
    $region43: #{prior_focal_modifier_loss.1} parent=5 // pred_region
      %s391 = ssub.s32 %s10, 2
      // Predicated region
      $region45: #{prior_focal_modifier_loss.1} parent=43 // pred_check
        %p392 = pneg %p133
      $region46: #{prior_focal_modifier_loss.1} parent=43 // pred_check_branch
        %394 = sbr.rel (%p392) target = $region48
      $region47: #{prior_focal_modifier_loss.1} parent=43 // pred_region
        %p395 = scmp.lt.s32.totalorder %s16, 2
        %s396 = scalar_select %p395, %s16, 2
        %s397 = scalar_lea.vmem %s4, %s396
      $region48: #{prior_focal_modifier_loss.1} parent=43 // pred_fallthru
        _
    $region44: #{prior_focal_modifier_loss.1} parent=5 // pred_fallthru
      _
  $region6: #{prior_focal_modifier_loss.1} parent=0 // loop_footer
    %s14 = sadd.s32 1, %s10
  $region7: #{prior_focal_modifier_loss.1} parent=0 // loop_footer_branch
    %9 = sbr.rel target = $region3
  $region8: #{prior_focal_modifier_loss.1} parent=0 // loop_exit
    _

</llo_original>
